<compile_context>
chip_gen: v5e
topology: v5e:2x2
jax: 0.10.0
libtpu: 0.0.40
codegen_flags: <defaults>
</compile_context>

<pallas_src>
import jax
import jax.numpy as jnp
from jax.experimental import pallas as pl
from jax.experimental.pallas import tpu as pltpu


def _round_up(x, m):
    return ((x + m - 1) // m) * m


def _actor_kernel(scale_ref, s_ref, w1_ref, b1_ref, w3_ref, b3_ref, o_ref):
    # scale_ref: (1,1) f32 in SMEM, holds max_action.
    max_action = scale_ref[0, 0]
    # Layer 1: Linear(state_dim -> hidden_padded) + ReLU, f32 accumulation on the MXU.
    h = jnp.dot(s_ref[...], w1_ref[...], preferred_element_type=jnp.float32)
    h = jnp.maximum(h + b1_ref[...], 0.0)            # b1 is (1, H_PAD), broadcasts
    # Layer 3: Linear(hidden_padded -> action_dim) + sigmoid, scaled by max_action.
    z = jnp.dot(h, w3_ref[...], preferred_element_type=jnp.float32) + b3_ref[...]
    o_ref[...] = (max_action * jax.nn.sigmoid(z)).astype(o_ref.dtype)


def prepare_params(w1, b1, w3, b3, max_action):
    """One-time (NOT per-forward) padding/casting of parameters.

    w1: (state_dim, hidden), b1: (hidden,), w3: (hidden, action_dim), b3: (action_dim,)
    Hidden dim is zero-padded to a multiple of 128 lanes; the output dim stays narrow.
    Zero padding is exact: padded hidden columns are relu(0)=0 and hit zero rows of w3.
    """
    hidden = w1.shape[1]
    H_PAD = _round_up(hidden, 128)
    f32 = jnp.float32
    w1_p = jnp.pad(w1.astype(f32), ((0, 0), (0, H_PAD - hidden)))
    b1_p = jnp.pad(b1.astype(f32), (0, H_PAD - hidden)).reshape(1, H_PAD)
    w3_p = jnp.pad(w3.astype(f32), ((0, H_PAD - hidden), (0, 0)))
    b3_p = b3.astype(f32).reshape(1, -1)
    scale = jnp.asarray(max_action, f32).reshape(1, 1)
    return w1_p, b1_p, w3_p, b3_p, scale


def multicri_actor_forward(state, w1_p, b1_p, w3_p, b3_p, scale, *, tb=4096):
    """state: (B, state_dim) -> (B, action_dim) f32. Params must come from prepare_params."""
    B, state_dim = state.shape
    H_PAD = w1_p.shape[1]
    action_dim = w3_p.shape[1]

    # Batch tile: multiple of 8 sublanes, capped at round_up(B, 8); no batch padding —
    # the grid uses cdiv and Pallas clips the final partial block.
    TB = min(_round_up(tb, 8), _round_up(B, 8))
    grid = (pl.cdiv(B, TB),)

    out = pl.pallas_call(
        _actor_kernel,
        out_shape=jax.ShapeDtypeStruct((B, action_dim), jnp.float32),
        grid=grid,
        in_specs=[
            # max_action scalar lives in SMEM; whole (1,1) array, untiled.
            pl.BlockSpec(memory_space=pltpu.MemorySpace.SMEM),
            # state tile marches down the batch axis (double-buffered by Pallas).
            pl.BlockSpec((TB, state_dim), lambda i: (i, 0)),
            # tiny weights/biases: constant index_map -> stay VMEM-resident.
            pl.BlockSpec((state_dim, H_PAD), lambda i: (0, 0)),
            pl.BlockSpec((1, H_PAD), lambda i: (0, 0)),
            pl.BlockSpec((H_PAD, action_dim), lambda i: (0, 0)),
            pl.BlockSpec((1, action_dim), lambda i: (0, 0)),
        ],
        # Narrow output block: only the real action_dim lanes are written back to HBM.
        out_specs=pl.BlockSpec((TB, action_dim), lambda i: (i, 0)),
        compiler_params=pltpu.CompilerParams(
            dimension_semantics=("parallel",),
        ),
    )(scale, state.astype(jnp.float32), w1_p, b1_p, w3_p, b3_p)
    return out


def init_params(key, state_dim, action_dim, hidden=32):
    """Deterministic init mimicking nn.Linear default: U(-1/sqrt(fan_in), 1/sqrt(fan_in)).
       Weights are stored pre-transposed as (in_features, out_features)."""
    k1, k2, k3, k4 = jax.random.split(key, 4)
    lim1 = 1.0 / jnp.sqrt(state_dim)
    lim3 = 1.0 / jnp.sqrt(hidden)
    w1 = jax.random.uniform(k1, (state_dim, hidden), jnp.float32, -lim1, lim1)
    b1 = jax.random.uniform(k2, (hidden,), jnp.float32, -lim1, lim1)
    w3 = jax.random.uniform(k3, (hidden, action_dim), jnp.float32, -lim3, lim3)
    b3 = jax.random.uniform(k4, (action_dim,), jnp.float32, -lim3, lim3)
    # NOTE: self.l2 exists in the PyTorch __init__ but is unused in forward, so it is
    # intentionally omitted here.
    return w1, b1, w3, b3


if __name__ == "__main__":
    batch = 2
    state_dim = 16
    action_dim = 4
    max_action = 2.0

    key = jax.random.PRNGKey(0)
    k_state, k_params = jax.random.split(key)
    state = jax.random.normal(k_state, (batch, state_dim), jnp.float32)
    w1, b1, w3, b3 = init_params(k_params, state_dim, action_dim)

    # One-time parameter preparation (padding/casting hoisted out of the call path).
    w1_p, b1_p, w3_p, b3_p, scale = prepare_params(w1, b1, w3, b3, max_action)

    out = multicri_actor_forward(state, w1_p, b1_p, w3_p, b3_p, scale)
    out = jax.block_until_ready(out)

    # Pure-JAX reference check.
    ref = max_action * jax.nn.sigmoid(
        jnp.maximum(state @ w1 + b1, 0.0) @ w3 + b3
    )
    assert out.shape == (batch, action_dim)
    assert jnp.allclose(out, ref, atol=1e-4, rtol=1e-4)
    print("KERNEL_OK")
</pallas_src>

<mosaic_0001>
module attributes {stable_mosaic.version = 11 : i64} {
  func.func @_actor_kernel(%arg0: i32, %arg1: memref<1x1xf32, #tpu.memory_space<smem>>, %arg2: memref<8x16xf32, #tpu.memory_space<vmem>>, %arg3: memref<16x128xf32, #tpu.memory_space<vmem>>, %arg4: memref<1x128xf32, #tpu.memory_space<vmem>>, %arg5: memref<128x4xf32, #tpu.memory_space<vmem>>, %arg6: memref<1x4xf32, #tpu.memory_space<vmem>>, %arg7: memref<8x4xf32, #tpu.memory_space<vmem>>) attributes {dimension_semantics = [#tpu.dimension_semantics<parallel>], iteration_bounds = array<i64: 1>, scalar_prefetch = 0 : i64, scratch_operands = 0 : i64, tpu.core_type = #tpu.core_type<tc>, window_params = [{transform_indices = @transform_0, window_bounds = array<i64: 1, 1>}, {transform_indices = @transform_1, window_bounds = array<i64: 8, 16>}, {pipeline_mode = #tpu.pipeline_mode<synchronous>, transform_indices = @transform_2, window_bounds = array<i64: 16, 128>}, {pipeline_mode = #tpu.pipeline_mode<synchronous>, transform_indices = @transform_3, window_bounds = array<i64: 1, 128>}, {pipeline_mode = #tpu.pipeline_mode<synchronous>, transform_indices = @transform_4, window_bounds = array<i64: 128, 4>}, {pipeline_mode = #tpu.pipeline_mode<synchronous>, transform_indices = @transform_5, window_bounds = array<i64: 1, 4>}, {transform_indices = @transform_6, window_bounds = array<i64: 8, 4>}]} {
    %c0 = arith.constant 0 : index
    %c0_0 = arith.constant 0 : index
    %0 = memref.load %arg1[%c0, %c0_0] : memref<1x1xf32, #tpu.memory_space<smem>>
    %c0_1 = arith.constant 0 : index
    %c0_2 = arith.constant 0 : index
    %1 = vector.load %arg2[%c0_1, %c0_2] : memref<8x16xf32, #tpu.memory_space<vmem>>, vector<8x16xf32>
    %c0_3 = arith.constant 0 : index
    %c0_4 = arith.constant 0 : index
    %2 = vector.load %arg3[%c0_3, %c0_4] : memref<16x128xf32, #tpu.memory_space<vmem>>, vector<16x128xf32>
    %cst = arith.constant dense<0.000000e+00> : vector<8x128xf32>
    %3 = tpu.matmul %1, %2, %cst {dimension_numbers = #tpu.dot_dimension_numbers<[1], [0], [0], [1], [0, 0, 1, 1], [], []>} : vector<8x16xf32>, vector<16x128xf32>, vector<8x128xf32> -> vector<8x128xf32>
    %c0_5 = arith.constant 0 : index
    %c0_6 = arith.constant 0 : index
    %4 = vector.load %arg4[%c0_5, %c0_6] : memref<1x128xf32, #tpu.memory_space<vmem>>, vector<1x128xf32>
    %5 = vector.broadcast %4 : vector<1x128xf32> to vector<8x128xf32>
    %6 = arith.addf %3, %5 : vector<8x128xf32>
    %cst_7 = arith.constant 0.000000e+00 : f32
    %7 = vector.broadcast %cst_7 : f32 to vector<8x128xf32>
    %8 = arith.maximumf %6, %7 : vector<8x128xf32>
    %c0_8 = arith.constant 0 : index
    %c0_9 = arith.constant 0 : index
    %9 = vector.load %arg5[%c0_8, %c0_9] : memref<128x4xf32, #tpu.memory_space<vmem>>, vector<128x4xf32>
    %cst_10 = arith.constant dense<0.000000e+00> : vector<8x4xf32>
    %10 = tpu.matmul %8, %9, %cst_10 {dimension_numbers = #tpu.dot_dimension_numbers<[1], [0], [0], [1], [0, 0, 1, 1], [], []>} : vector<8x128xf32>, vector<128x4xf32>, vector<8x4xf32> -> vector<8x4xf32>
    %c0_11 = arith.constant 0 : index
    %c0_12 = arith.constant 0 : index
    %11 = vector.load %arg6[%c0_11, %c0_12] : memref<1x4xf32, #tpu.memory_space<vmem>>, vector<1x4xf32>
    %12 = vector.broadcast %11 : vector<1x4xf32> to vector<8x4xf32>
    %13 = arith.addf %10, %12 : vector<8x4xf32>
    %14 = arith.negf %13 : vector<8x4xf32>
    %15 = math.exp %14 : vector<8x4xf32>
    %cst_13 = arith.constant 1.000000e+00 : f32
    %16 = vector.broadcast %cst_13 : f32 to vector<8x4xf32>
    %17 = arith.addf %16, %15 : vector<8x4xf32>
    %18 = arith.divf %16, %17 : vector<8x4xf32>
    %19 = vector.broadcast %0 : f32 to vector<8x4xf32>
    %20 = arith.mulf %19, %18 : vector<8x4xf32>
    %c0_14 = arith.constant 0 : index
    %c0_15 = arith.constant 0 : index
    %21 = vector.load %arg7[%c0_14, %c0_15] : memref<8x4xf32, #tpu.memory_space<vmem>>, vector<8x4xf32>
    tpu.vector_store %arg7[%c0_14, %c0_15], %20 {strides = array<i32>} : memref<8x4xf32, #tpu.memory_space<vmem>>, vector<8x4xf32>,
    return
  }
  func.func @transform_0(%arg0: i32) -> (i32, i32) {
    %c0_i32 = arith.constant 0 : i32
    %c0_i32_0 = arith.constant 0 : i32
    %c0_i32_1 = arith.constant 0 : i32
    return %c0_i32, %c0_i32_0 : i32, i32
  }
  func.func @transform_1(%arg0: i32) -> (i32, i32) {
    %c0_i32 = arith.constant 0 : i32
    %c0_i32_0 = arith.constant 0 : i32
    return %arg0, %c0_i32 : i32, i32
  }
  func.func @transform_2(%arg0: i32) -> (i32, i32) {
    %c0_i32 = arith.constant 0 : i32
    %c0_i32_0 = arith.constant 0 : i32
    %c0_i32_1 = arith.constant 0 : i32
    return %c0_i32, %c0_i32_0 : i32, i32
  }
  func.func @transform_3(%arg0: i32) -> (i32, i32) {
    %c0_i32 = arith.constant 0 : i32
    %c0_i32_0 = arith.constant 0 : i32
    %c0_i32_1 = arith.constant 0 : i32
    return %c0_i32, %c0_i32_0 : i32, i32
  }
  func.func @transform_4(%arg0: i32) -> (i32, i32) {
    %c0_i32 = arith.constant 0 : i32
    %c0_i32_0 = arith.constant 0 : i32
    %c0_i32_1 = arith.constant 0 : i32
    return %c0_i32, %c0_i32_0 : i32, i32
  }
  func.func @transform_5(%arg0: i32) -> (i32, i32) {
    %c0_i32 = arith.constant 0 : i32
    %c0_i32_0 = arith.constant 0 : i32
    %c0_i32_1 = arith.constant 0 : i32
    return %c0_i32, %c0_i32_0 : i32, i32
  }
  func.func @transform_6(%arg0: i32) -> (i32, i32) {
    %c0_i32 = arith.constant 0 : i32
    %c0_i32_0 = arith.constant 0 : i32
    return %arg0, %c0_i32 : i32, i32
  }
}

</mosaic_0001>

<llo_original>
// kernel: tpu_custom_call.1
$region0: #{tpu_custom_call.1}
  #allocation0 [shape = 'u32[]', space=smem, size = 0x4, offset = 0x4, fixed_abs, tag = 'smem constant byte address 0x4 - core index']
  #allocation1 [shape = 'u32[72,128]{1,0:T(1,128)}', space=vmem, size = 0x9000, scoped, tag = 'internal scratch']
  #allocation2 [shape = 'f32[1,1]{1,0:T(1,128)S(6)}', space=smem, size = 0x200, scoped, tag = 'scoped memory for tpu_custom_call.1']
  %s0 = inlined_call_operand.<no memory space> [shape: f32[1,1], index: 0, kind: input, shape index: {}]
  %s1 = inlined_call_operand.vmem [shape: f32[2,16], index: 1, kind: input, shape index: {}]
  %s2 = inlined_call_operand.vmem [shape: f32[16,128], index: 2, kind: input, shape index: {}]
  %s3 = inlined_call_operand.vmem [shape: f32[1,128], index: 3, kind: input, shape index: {}]
  %s4 = inlined_call_operand.vmem [shape: f32[128,4], index: 4, kind: input, shape index: {}]
  %s5 = inlined_call_operand.vmem [shape: f32[1,4], index: 5, kind: input, shape index: {}]
  %s6 = inlined_call_operand.hbm [shape: f32[2,4], index: 6, kind: output, shape index: {}]
  %s7 = sld [smem:[#allocation0]]
  $region34: #{tpu_custom_call.1} parent=0
    _
  %s9 = ssub.s32 1, %s7
  %s10 = scalar_select 0, %s9, %s7
  %11 = sst [smem:[#allocation2]] %s0
  $region1: #{tpu_custom_call.1} parent=0
    #allocation3 [shape = 'u8[4096]{0}', space=vmem, size = 0x1000, scoped, tag = 'output window, operand 0, single buffered']
    #allocation4 [shape = 's32[1]{0}', space=sflag, size = 0x4, scoped, tag = 'scoped memory for tpu_custom_call.1']
    %12 = vsyncpa [#allocation4], 0
    // Predicated region
    $region2: #{tpu_custom_call.1} parent=1 // pred_check
      _
    $region3: #{tpu_custom_call.1} parent=1 // pred_check_branch
      %14 = sbr.rel (0) target = $region5
    $region4: #{tpu_custom_call.1} parent=1 // pred_region
      _
    $region5: #{tpu_custom_call.1} parent=1 // pred_fallthru
      _
    // Predicated region
    $region6: #{tpu_custom_call.1} parent=1 // pred_check
      _
    $region7: #{tpu_custom_call.1} parent=1 // pred_check_branch
      %16 = sbr.rel (0) target = $region9
    $region8: #{tpu_custom_call.1} parent=1 // pred_region
      _
    $region9: #{tpu_custom_call.1} parent=1 // pred_fallthru
      _
    // Predicated region
    $region10: #{tpu_custom_call.1} parent=1 // pred_check
      _
    $region11: #{tpu_custom_call.1} parent=1 // pred_check_branch
      %18 = sbr.rel (0) target = $region13
    $region12: #{tpu_custom_call.1} parent=1 // pred_region
      _
    $region13: #{tpu_custom_call.1} parent=1 // pred_fallthru
      _
    // Predicated region
    $region14: #{tpu_custom_call.1} parent=1 // pred_check
      _
    $region15: #{tpu_custom_call.1} parent=1 // pred_check_branch
      %20 = sbr.rel (0) target = $region17
    $region16: #{tpu_custom_call.1} parent=1 // pred_region
      _
    $region17: #{tpu_custom_call.1} parent=1 // pred_fallthru
      _
    // Predicated region
    $region18: #{tpu_custom_call.1} parent=1 // pred_check
      _
    $region19: #{tpu_custom_call.1} parent=1 // pred_check_branch
      %22 = sbr.rel (0) target = $region21
    $region20: #{tpu_custom_call.1} parent=1 // pred_region
      _
    $region21: #{tpu_custom_call.1} parent=1 // pred_fallthru
      _
    // Predicated region
    $region22: #{tpu_custom_call.1} parent=1 // pred_check
      _
    $region23: #{tpu_custom_call.1} parent=1 // pred_check_branch
      %24 = sbr.rel (0) target = $region25
    $region24: #{tpu_custom_call.1} parent=1 // pred_region
      _
    $region25: #{tpu_custom_call.1} parent=1 // pred_fallthru
      _
    %s25 = sld [smem:[#allocation2]]
    %v26 = vld [vmem:[%s1] sm:$0xff]
    %v27 = vld [vmem:[%s2] sm:$0xff]
    %v28 = vld [vmem:[%s2 + $0x8] sm:$0xff]
    %v29 = vld [vmem:[%s3] sm:$0x1]
    %v31 = vperm.slane %v29, 0
    %vm33 = vcmask 130048
    %v35 = vsel %vm33, %v26, 0
    %37 = vmatpush.msra.mxu0 0.0
    %38 = vmatpush.msra.mxu0 0.0
    %39 = vmatpush.msra.mxu0 0.0
    %40 = vmatpush.msra.mxu0 0.0
    %41 = vmatpush.msra.mxu0 0.0
    %42 = vmatpush.msra.mxu0 0.0
    %43 = vmatpush.msra.mxu0 0.0
    %44 = vmatpush.msra.mxu0 0.0
    %45 = vmatpush.msra.mxu0 0.0
    %46 = vmatpush.msra.mxu0 0.0
    %47 = vmatpush.msra.mxu0 0.0
    %48 = vmatpush.msra.mxu0 0.0
    %49 = vmatpush.msra.mxu0 0.0
    %50 = vmatpush.msra.mxu0 0.0
    %51 = vmatpush.msra.mxu0 %v28
    %52 = vmatpush.msra.mxu0 %v27
    %53 = vmatmul.f32.gmra.mxu0 %v35
    %v54 = vpop.f32.mrf.mxu0
    %v55 = vadd.f32 %v31, %v54
    %56 = vdwg.mxu0
    %v57 = vmax.f32 %v55, 0.0
    %v58 = vld [vmem:[%s4] sm:$0xff]
    %v59 = vld [vmem:[%s4 + $0x8] sm:$0xff]
    %v60 = vld [vmem:[%s4 + $0x10] sm:$0xff]
    %v61 = vld [vmem:[%s4 + $0x18] sm:$0xff]
    %v62 = vld [vmem:[%s4 + $0x20] sm:$0xff]
    %v63 = vld [vmem:[%s4 + $0x28] sm:$0xff]
    %v64 = vld [vmem:[%s4 + $0x30] sm:$0xff]
    %v65 = vld [vmem:[%s4 + $0x38] sm:$0xff]
    %v66 = vld [vmem:[%s4 + $0x40] sm:$0xff]
    %v67 = vld [vmem:[%s4 + $0x48] sm:$0xff]
    %v68 = vld [vmem:[%s4 + $0x50] sm:$0xff]
    %v69 = vld [vmem:[%s4 + $0x58] sm:$0xff]
    %v70 = vld [vmem:[%s4 + $0x60] sm:$0xff]
    %v71 = vld [vmem:[%s4 + $0x68] sm:$0xff]
    %v72 = vld [vmem:[%s4 + $0x70] sm:$0xff]
    %v73 = vld [vmem:[%s4 + $0x78] sm:$0xff]
    %v74 = vld [vmem:[%s5] sm:$0x1]
    %v76 = vperm.slane %v74, 0
    %78 = vmatpush.msra.mxu0 %v73
    %79 = vmatpush.msra.mxu0 %v72
    %80 = vmatpush.msra.mxu0 %v71
    %81 = vmatpush.msra.mxu0 %v70
    %82 = vmatpush.msra.mxu0 %v69
    %83 = vmatpush.msra.mxu0 %v68
    %84 = vmatpush.msra.mxu0 %v67
    %85 = vmatpush.msra.mxu0 %v66
    %86 = vmatpush.msra.mxu0 %v65
    %87 = vmatpush.msra.mxu0 %v64
    %88 = vmatpush.msra.mxu0 %v63
    %89 = vmatpush.msra.mxu0 %v62
    %90 = vmatpush.msra.mxu0 %v61
    %91 = vmatpush.msra.mxu0 %v60
    %92 = vmatpush.msra.mxu0 %v59
    %93 = vmatpush.msra.mxu0 %v58
    %94 = vmatmul.f32.gmra.mxu0 %v57
    %v95 = vpop.f32.mrf.mxu0
    %v96 = vadd.f32 %v76, %v95
    %97 = vdwg.mxu0
    %v98 = vxor.u32 %v96, 2147483648
    %v99 = vmul.f32 %v98, 1.442695
    %v100 = vpow.pop %v99
    %v101 = vadd.f32 %v100, 1.0
    %v102 = vrcp.pop %v101
    %v103 = vmul.f32 %v101, %v102
    %v104 = vsub.f32 1.0, %v103
    %v105 = vmul.f32 %v102, %v104
    %v106 = vadd.f32 %v102, %v105
    %vm107 = vweird.f32 %v101
    %vm108 = vweird.f32 %v102
    %vm109 = vmor %vm107, %vm108
    %v110 = vsel %vm109, %v102, %v106
    %v111 = vand.u32 2147483647, %v101
    %vm112 = vcmp.eq.f32.partialorder %v111, 8.507059e+37
    %v113 = vand.u32 %v101, 2147483648
    %v114 = vor.u32 1.1754944e-38, %v113
    %v115 = vsel %vm112, %v114, %v110
    %v116 = vmul.f32 1.0, %v115
    %v117 = vstv %s25
    %v118 = vmul.f32 %v117, %v116
    %vm119 = vcmask 31744
    %120 = vst.msk [vmem:[#allocation3] sm:$0xff] %vm119, %v118
    // Predicated region
    $region26: #{tpu_custom_call.1} parent=1 // pred_check
      _
    $region27: #{tpu_custom_call.1} parent=1 // pred_check_branch
      %122 = sbr.rel (0) target = $region29
    $region28: #{tpu_custom_call.1} parent=1 // pred_region
      %124 = vsyncadd [#allocation4], 96
      %s125 = sshll.u32 [#allocation3], 4
      %s126 = int_to_ptr.vmem [resolvable:$true] %s125
      %s127 = sshll.u32 %s6, 4
      %s128 = int_to_ptr.hbm [resolvable:$true] %s127
      %133 = dma.vmem_to_hbm [thread:$0]  %s126, 32, %s128, [#allocation4], 32, 32, 2
    $region29: #{tpu_custom_call.1} parent=1 // pred_fallthru
      _
    // Predicated region
    $region30: #{tpu_custom_call.1} parent=1 // pred_check
      _
    $region31: #{tpu_custom_call.1} parent=1 // pred_check_branch
      %135 = sbr.rel (0) target = $region33
    $region32: #{tpu_custom_call.1} parent=1 // pred_region
      %137 = dma.done [#allocation4], 128
    $region33: #{tpu_custom_call.1} parent=1 // pred_fallthru
      _
    %138 = vsyncpa [#allocation4], 1

</llo_original>
